<compile_context>
chip_gen: v5e
topology: v5e:2x2
jax: 0.10.0
libtpu: 0.0.40
codegen_flags: <defaults>
</compile_context>

<pallas_src>
import functools

import jax
import jax.numpy as jnp
from jax.experimental import pallas as pl
from jax.experimental.pallas import tpu as pltpu


def _final_layer_kernel(z_ref, w_ref, csum_ref, beff_ref, o_ref, *,
                        inv_h: float, eps: float):
    # out = (LayerNorm(z) * (1+scale) + shift) @ W_lin + b_lin, with modulation
    # and the norm scale folded into per-batch weights:
    #   out = inv_std * (z @ W_eff) - (mean * inv_std) * colsum(W_eff) + b_eff
    z = z_ref[0]                                            # (TN, H) native dtype
    zf = z.astype(jnp.float32)

    # Single-pass LayerNorm stats in f32; clamp var >= 0 (cancellation safety
    # and NaN-proofing of garbage rows in a ragged last tile).
    mean = jnp.sum(zf, axis=-1, keepdims=True) * inv_h      # (TN, 1)
    mean_sq = jnp.sum(zf * zf, axis=-1, keepdims=True) * inv_h
    var = jnp.maximum(mean_sq - mean * mean, 0.0)
    inv_std = jax.lax.rsqrt(var + eps)                      # (TN, 1)

    # MXU: raw z tile against the per-batch folded weight, f32 accumulation.
    acc = jnp.dot(z.astype(w_ref.dtype), w_ref[0],
                  preferred_element_type=jnp.float32)       # (TN, Fd)

    # Small (TN, Fd) epilogue only (Fd << H).
    out = inv_std * acc - (mean * inv_std) * csum_ref[0] + beff_ref[0]
    o_ref[0] = out.astype(o_ref.dtype)


def _choose_tn(n: int, b: int, h: int, z_itemsize: int,
               budget_bytes: int = 24 * 1024 * 1024) -> int:
    """Largest legal sequence tile that fits the per-step VMEM budget."""
    if n <= 8:
        return n  # block dim equals the full array dim -> always legal.

    def fits(tn):
        # 2x double-buffered z + ~4 live f32 (tn, h) temps.
        return (2 * tn * h * z_itemsize + 4 * tn * h * 4) <= budget_bytes

    cands = [t for t in (8, 16, 32, 64, 128, 256, 512, 1024) if t <= n]
    if b >= 2 and n <= 1024:
        cands.append(n)  # full-N block is legal and cuts per-step overhead.
    best = 8
    for t in cands:
        if fits(t) and t >= best:
            best = t
    # Keep both v7x TensorCores busy when B == 1: >= 2 grid steps along N.
    if b == 1:
        while best > 8 and pl.cdiv(n, best) < 2:
            best //= 2
    return best


def _vmem_limit_bytes(tn, h, fd, z_itemsize, w_itemsize, out_itemsize) -> int:
    io_blocks = 2 * (tn * h * z_itemsize       # z (double-buffered)
                     + h * fd * w_itemsize     # W_eff
                     + 2 * fd * 4              # csum + b_eff (f32)
                     + tn * fd * out_itemsize)  # output
    temps = 4 * tn * h * 4 + 2 * tn * fd * 4   # live f32 intermediates
    est = 2 * (io_blocks + temps)              # 2x headroom for compiler scratch
    return int(min(max(est, 8 * 1024 * 1024), 32 * 1024 * 1024))


def final_layer_pallas(z_emb, cond, w_mod, b_mod, w_lin, b_lin, *,
                       eps=1e-6, mxu_dtype=None):
    B, N, H = z_emb.shape
    Fd = w_lin.shape[1]
    assert cond.shape == (B, 1, H)
    assert w_mod.shape == (H, 2 * H) and b_mod.shape == (2 * H,)
    assert w_lin.shape == (H, Fd) and b_lin.shape == (Fd,)

    # ---- conditioning path + weight folding in the wrapper (tiny: B rows) ----
    c = cond[:, 0, :].astype(jnp.float32)                   # (B, H)
    c = c * jax.nn.sigmoid(c)                               # SiLU
    mod = c @ w_mod.astype(jnp.float32) + b_mod.astype(jnp.float32)  # (B, 2H)
    shift, scale = jnp.split(mod, 2, axis=-1)               # (B, H) each
    scale1 = 1.0 + scale                                    # (B, H)

    w_f32 = w_lin.astype(jnp.float32)                       # (H, Fd)
    w_eff_f32 = scale1[:, :, None] * w_f32[None, :, :]      # (B, H, Fd)
    csum = (scale1 @ w_f32)[:, None, :]                     # (B, 1, Fd) f32
    b_eff = (shift @ w_f32 + b_lin.astype(jnp.float32))[:, None, :]  # (B, 1, Fd)

    mm_dtype = jnp.dtype(mxu_dtype) if mxu_dtype is not None else w_lin.dtype
    w_eff = w_eff_f32.astype(mm_dtype)                      # (B, H, Fd)

    z_isz = jnp.dtype(z_emb.dtype).itemsize
    TN = _choose_tn(N, B, H, z_isz)
    grid = (B, pl.cdiv(N, TN))

    kernel = functools.partial(_final_layer_kernel, inv_h=1.0 / H, eps=eps)

    out = pl.pallas_call(
        kernel,
        out_shape=jax.ShapeDtypeStruct((B, N, Fd), z_emb.dtype),
        grid_spec=pltpu.PrefetchScalarGridSpec(
            num_scalar_prefetch=0,
            grid=grid,
            in_specs=[
                pl.BlockSpec((1, TN, H), lambda b, n: (b, n, 0)),   # z_emb
                pl.BlockSpec((1, H, Fd), lambda b, n: (b, 0, 0)),   # W_eff[b]
                pl.BlockSpec((1, 1, Fd), lambda b, n: (b, 0, 0)),   # colsum(W_eff[b])
                pl.BlockSpec((1, 1, Fd), lambda b, n: (b, 0, 0)),   # b_eff[b]
            ],
            out_specs=pl.BlockSpec((1, TN, Fd), lambda b, n: (b, n, 0)),
        ),
        compiler_params=pltpu.CompilerParams(
            dimension_semantics=("parallel", "parallel"),
            vmem_limit_bytes=_vmem_limit_bytes(
                TN, H, Fd, z_isz, jnp.dtype(mm_dtype).itemsize, z_isz)),
    )(z_emb, w_eff, csum, b_eff)

    return out


def final_layer_ref(z_emb, cond, w_mod, b_mod, w_lin, b_lin, *, eps=1e-6):
    """Pure-JAX reference mirroring the PyTorch forward."""
    c = cond * jax.nn.sigmoid(cond)                         # SiLU
    mod = c @ w_mod + b_mod                                 # (B, 1, 2H)
    shift, scale = jnp.split(mod, 2, axis=-1)
    shift = shift[:, 0, :]                                  # squeeze(1) -> (B, H)
    scale = scale[:, 0, :]
    mean = jnp.mean(z_emb, axis=-1, keepdims=True)
    var = jnp.mean(jnp.square(z_emb - mean), axis=-1, keepdims=True)
    z_norm = (z_emb - mean) * jax.lax.rsqrt(var + eps)
    z_mod = z_norm * (1.0 + scale[:, None, :]) + shift[:, None, :]
    return z_mod @ w_lin + b_lin


if __name__ == "__main__":
    B, N, H, Fd = 2, 8, 32, 16      # batch, seq, hidden_size, final_dim

    key = jax.random.PRNGKey(0)
    k1, k2, k3, k4, k5, k6 = jax.random.split(key, 6)

    z_emb = jax.random.normal(k1, (B, N, H), dtype=jnp.float32)
    cond = jax.random.normal(k2, (B, 1, H), dtype=jnp.float32)

    # deterministic parameter init (synthetic; not a checkpoint load)
    w_mod = jax.random.normal(k3, (H, 2 * H), dtype=jnp.float32) * 0.02
    b_mod = jax.random.normal(k4, (2 * H,), dtype=jnp.float32) * 0.02
    w_lin = jax.random.normal(k5, (H, Fd), dtype=jnp.float32) * 0.02
    b_lin = jax.random.normal(k6, (Fd,), dtype=jnp.float32) * 0.02

    # ---- f32 path (f32 weights -> f32 matmul) ----
    out = jax.block_until_ready(
        final_layer_pallas(z_emb, cond, w_mod, b_mod, w_lin, b_lin))
    ref = final_layer_ref(z_emb, cond, w_mod, b_mod, w_lin, b_lin)
    assert out.shape == (B, N, Fd)
    assert jnp.allclose(out, ref, atol=2e-4, rtol=2e-4), "f32 mismatch vs reference"

    # ---- bf16 path (bf16 weights/activations -> bf16 MXU matmul) ----
    bf = lambda a: a.astype(jnp.bfloat16)
    f32 = lambda a: a.astype(jnp.float32)
    out_b = jax.block_until_ready(
        final_layer_pallas(bf(z_emb), bf(cond), bf(w_mod), bf(b_mod),
                           bf(w_lin), bf(b_lin)))
    ref_b = final_layer_ref(f32(bf(z_emb)), f32(bf(cond)), f32(bf(w_mod)),
                            f32(bf(b_mod)), f32(bf(w_lin)), f32(bf(b_lin)))
    assert out_b.shape == (B, N, Fd)
    assert float(jnp.max(jnp.abs(f32(out_b) - ref_b))) < 5e-2, \
        "bf16 mismatch vs f32 reference"

    print("KERNEL_OK")
</pallas_src>

<mosaic_0001>
module attributes {stable_mosaic.version = 11 : i64} {
  func.func @_final_layer_kernel(%arg0: i32, %arg1: i32, %arg2: memref<1x8x32xf32, #tpu.memory_space<vmem>>, %arg3: memref<1x32x16xf32, #tpu.memory_space<vmem>>, %arg4: memref<1x1x16xf32, #tpu.memory_space<vmem>>, %arg5: memref<1x1x16xf32, #tpu.memory_space<vmem>>, %arg6: memref<1x8x16xf32, #tpu.memory_space<vmem>>) attributes {dimension_semantics = [#tpu.dimension_semantics<parallel>, #tpu.dimension_semantics<parallel>], iteration_bounds = array<i64: 2, 1>, scalar_prefetch = 0 : i64, scratch_operands = 0 : i64, tpu.core_type = #tpu.core_type<tc>, window_params = [{transform_indices = @transform_0, window_bounds = array<i64: 1, 8, 32>}, {transform_indices = @transform_1, window_bounds = array<i64: 1, 32, 16>}, {transform_indices = @transform_2, window_bounds = array<i64: 1, 1, 16>}, {transform_indices = @transform_3, window_bounds = array<i64: 1, 1, 16>}, {transform_indices = @transform_4, window_bounds = array<i64: 1, 8, 16>}]} {
    %c0 = arith.constant 0 : index
    %c0_0 = arith.constant 0 : index
    %c0_1 = arith.constant 0 : index
    %0 = vector.load %arg2[%c0, %c0_0, %c0_1] : memref<1x8x32xf32, #tpu.memory_space<vmem>>, vector<1x8x32xf32>
    %1 = vector.shape_cast %0 : vector<1x8x32xf32> to vector<8x32xf32>
    %cst = arith.constant dense<0.000000e+00> : vector<8xf32>
    %2 = vector.multi_reduction <add>, %1, %cst [1] : vector<8x32xf32> to vector<8xf32>
    %3 = vector.shape_cast %2 : vector<8xf32> to vector<8x1xf32>
    %cst_2 = arith.constant 3.125000e-02 : f32
    %4 = vector.broadcast %cst_2 : f32 to vector<8x1xf32>
    %5 = arith.mulf %3, %4 : vector<8x1xf32>
    %6 = arith.mulf %1, %1 : vector<8x32xf32>
    %cst_3 = arith.constant dense<0.000000e+00> : vector<8xf32>
    %7 = vector.multi_reduction <add>, %6, %cst_3 [1] : vector<8x32xf32> to vector<8xf32>
    %8 = vector.shape_cast %7 : vector<8xf32> to vector<8x1xf32>
    %cst_4 = arith.constant 3.125000e-02 : f32
    %9 = vector.broadcast %cst_4 : f32 to vector<8x1xf32>
    %10 = arith.mulf %8, %9 : vector<8x1xf32>
    %11 = arith.mulf %5, %5 : vector<8x1xf32>
    %12 = arith.subf %10, %11 : vector<8x1xf32>
    %cst_5 = arith.constant 0.000000e+00 : f32
    %13 = vector.broadcast %cst_5 : f32 to vector<8x1xf32>
    %14 = arith.maximumf %12, %13 : vector<8x1xf32>
    %cst_6 = arith.constant 9.99999997E-7 : f32
    %15 = vector.broadcast %cst_6 : f32 to vector<8x1xf32>
    %16 = arith.addf %14, %15 : vector<8x1xf32>
    %17 = math.rsqrt %16 : vector<8x1xf32>
    %c0_7 = arith.constant 0 : index
    %c0_8 = arith.constant 0 : index
    %c0_9 = arith.constant 0 : index
    %18 = vector.load %arg3[%c0_7, %c0_8, %c0_9] : memref<1x32x16xf32, #tpu.memory_space<vmem>>, vector<1x32x16xf32>
    %19 = vector.shape_cast %18 : vector<1x32x16xf32> to vector<32x16xf32>
    %cst_10 = arith.constant dense<0.000000e+00> : vector<8x16xf32>
    %20 = tpu.matmul %1, %19, %cst_10 {dimension_numbers = #tpu.dot_dimension_numbers<[1], [0], [0], [1], [0, 0, 1, 1], [], []>} : vector<8x32xf32>, vector<32x16xf32>, vector<8x16xf32> -> vector<8x16xf32>
    %21 = vector.broadcast %17 : vector<8x1xf32> to vector<8x16xf32>
    %22 = arith.mulf %21, %20 : vector<8x16xf32>
    %23 = arith.mulf %5, %17 : vector<8x1xf32>
    %c0_11 = arith.constant 0 : index
    %c0_12 = arith.constant 0 : index
    %c0_13 = arith.constant 0 : index
    %24 = vector.load %arg4[%c0_11, %c0_12, %c0_13] : memref<1x1x16xf32, #tpu.memory_space<vmem>>, vector<1x1x16xf32>
    %25 = vector.shape_cast %24 : vector<1x1x16xf32> to vector<1x16xf32>
    %26 = vector.broadcast %23 : vector<8x1xf32> to vector<8x16xf32>
    %27 = vector.broadcast %25 : vector<1x16xf32> to vector<8x16xf32>
    %28 = arith.mulf %26, %27 : vector<8x16xf32>
    %29 = arith.subf %22, %28 : vector<8x16xf32>
    %c0_14 = arith.constant 0 : index
    %c0_15 = arith.constant 0 : index
    %c0_16 = arith.constant 0 : index
    %30 = vector.load %arg5[%c0_14, %c0_15, %c0_16] : memref<1x1x16xf32, #tpu.memory_space<vmem>>, vector<1x1x16xf32>
    %31 = vector.shape_cast %30 : vector<1x1x16xf32> to vector<1x16xf32>
    %32 = vector.broadcast %31 : vector<1x16xf32> to vector<8x16xf32>
    %33 = arith.addf %29, %32 : vector<8x16xf32>
    %c0_17 = arith.constant 0 : index
    %c0_18 = arith.constant 0 : index
    %c0_19 = arith.constant 0 : index
    %34 = vector.load %arg6[%c0_17, %c0_18, %c0_19] : memref<1x8x16xf32, #tpu.memory_space<vmem>>, vector<1x8x16xf32>
    %35 = vector.shape_cast %34 : vector<1x8x16xf32> to vector<8x16xf32>
    %36 = vector.shape_cast %33 : vector<8x16xf32> to vector<1x8x16xf32>
    tpu.vector_store %arg6[%c0_17, %c0_18, %c0_19], %36 {strides = array<i32>} : memref<1x8x16xf32, #tpu.memory_space<vmem>>, vector<1x8x16xf32>,
    return
  }
  func.func @transform_0(%arg0: i32, %arg1: i32) -> (i32, i32, i32) {
    %c0_i32 = arith.constant 0 : i32
    %c0_i32_0 = arith.constant 0 : i32
    return %arg0, %arg1, %c0_i32 : i32, i32, i32
  }
  func.func @transform_1(%arg0: i32, %arg1: i32) -> (i32, i32, i32) {
    %c0_i32 = arith.constant 0 : i32
    %c0_i32_0 = arith.constant 0 : i32
    %c0_i32_1 = arith.constant 0 : i32
    return %arg0, %c0_i32, %c0_i32_0 : i32, i32, i32
  }
  func.func @transform_2(%arg0: i32, %arg1: i32) -> (i32, i32, i32) {
    %c0_i32 = arith.constant 0 : i32
    %c0_i32_0 = arith.constant 0 : i32
    %c0_i32_1 = arith.constant 0 : i32
    return %arg0, %c0_i32, %c0_i32_0 : i32, i32, i32
  }
  func.func @transform_3(%arg0: i32, %arg1: i32) -> (i32, i32, i32) {
    %c0_i32 = arith.constant 0 : i32
    %c0_i32_0 = arith.constant 0 : i32
    %c0_i32_1 = arith.constant 0 : i32
    return %arg0, %c0_i32, %c0_i32_0 : i32, i32, i32
  }
  func.func @transform_4(%arg0: i32, %arg1: i32) -> (i32, i32, i32) {
    %c0_i32 = arith.constant 0 : i32
    %c0_i32_0 = arith.constant 0 : i32
    return %arg0, %arg1, %c0_i32 : i32, i32, i32
  }
}

</mosaic_0001>

<llo_original>
// kernel: tpu_custom_call.1
$region0: #{tpu_custom_call.1}
  #allocation0 [shape = 'u32[]', space=smem, size = 0x4, offset = 0x4, fixed_abs, tag = 'smem constant byte address 0x4 - core index']
  #allocation1 [shape = 'u32[72,128]{1,0:T(1,128)}', space=vmem, size = 0x9000, scoped, tag = 'internal scratch']
  %s0 = inlined_call_operand.vmem [shape: f32[2,8,32], index: 0, kind: input, shape index: {}]
  %s1 = inlined_call_operand.vmem [shape: f32[2,32,16], index: 1, kind: input, shape index: {}]
  %s2 = inlined_call_operand.vmem [shape: f32[2,1,16], index: 2, kind: input, shape index: {}]
  %s3 = inlined_call_operand.vmem [shape: f32[2,1,16], index: 3, kind: input, shape index: {}]
  %s4 = inlined_call_operand.hbm [shape: f32[2,8,16], index: 4, kind: output, shape index: {}]
  %s5 = sld [smem:[#allocation0]]
  $region49: #{tpu_custom_call.1} parent=0
    _
  %s7 = ssub.s32 1, %s5
  %s8 = scalar_select 0, %s7, %s5
  $region1: #{tpu_custom_call.1} parent=0
    #allocation2 [shape = 'u8[8192]{0}', space=vmem, size = 0x2000, scoped, tag = 'output window, operand 0']
    #allocation3 [shape = 's32[2]{0}', space=sflag, size = 0x8, scoped, tag = 'scoped memory for tpu_custom_call.1']
    %9 = vsyncpa [#allocation3], 0
    %s10 = scalar_lea.sflag [#allocation3], 1
    %11 = vsyncpa %s10, 0
    loop: start=0, step=1, limit=4
    $region2: #{tpu_custom_call.1} parent=1 // loop_pre_header
      _
    $region3: #{tpu_custom_call.1} parent=1 // loop_header
      %s13 = sphi 0, %s17
      %p14 = scmp.ge.s32.totalorder %s13, 4
      %s20 = sphi 0, %s32
      %s21 = sphi 0, %s28
      %s22 = sphi 0, %s20
      %s23 = sphi 0, %s21
      %s24 = sphi 0, %s22
      %s25 = sphi 0, %s23
      %s37 = sphi 0, %s39
      %s40 = sphi 0, %s37
      %s41 = sphi 0, %s40
      %s57 = sphi 0, %s41
      %s63 = sphi 0, %s65
      %s66 = sphi 0, %s63
      %s67 = sphi 0, %s66
      %s83 = sphi 0, %s67
      %s89 = sphi 0, %s91
      %s92 = sphi 0, %s89
      %s93 = sphi 0, %s92
      %s109 = sphi 0, %s93
      %s115 = sphi 0, %s117
      %s118 = sphi 0, %s115
      %s119 = sphi 0, %s118
      %s135 = sphi 0, %s119
      %s143 = sphi 0, %s145
      %s146 = sphi 0, %s143
      %s147 = sphi 0, %s146
      %s163 = sphi 0, %s147
    $region4: #{tpu_custom_call.1} parent=1 // loop_header_branch
      %16 = sbr.rel (%p14) target = $region8
    $region5: #{tpu_custom_call.1} parent=1 // loop_body
      %s18 = ssub.s32 %s13, 1
      %s19 = ssub.s32 %s13, 2
      %s26 = sadd.s32 1, %s21
      %p27 = scmp.ge.s32.totalorder %s26, 1
      %s28 = scalar_select %p27, 0, %s26
      %s29 = sadd.s32 1, %s20
      %s30 = scalar_select %p27, %s29, %s20
      %p31 = scmp.ge.s32.totalorder %s30, 2
      %s32 = scalar_select %p31, 0, %s30
      %s33 = ssub.s32 %s20, %s32
      %s34 = ssub.s32 %s21, %s28
      %s35 = sor.u32 %s33, %s34
      %p36 = scmp.eq.s32.totalorder %s35, 0
      %s38 = sadd.s32 %s37, 1
      %s39 = scalar_select %p36, %s37, %s38
      %p42 = pneg %p36
      %p43 = scmp.eq.s32.totalorder %s13, 1
      %p44 = por %p42, %p43
      %p45 = scmp.ne.s32.totalorder %s37, %s40
      %p46 = scmp.eq.s32.totalorder %s13, 0
      %p47 = por %p45, %p46
      %p48 = scmp.ne.s32.totalorder %s37, %s40
      %p49 = scmp.eq.s32.totalorder %s18, 1
      %p50 = por %p48, %p49
      %p51 = scmp.ne.s32.totalorder %s40, %s41
      %p52 = scmp.eq.s32.totalorder %s18, 0
      %p53 = por %p51, %p52
      %p54 = scmp.ne.s32.totalorder %s40, %s41
      %p55 = scmp.eq.s32.totalorder %s19, 1
      %p56 = por %p54, %p55
      %p58 = scmp.ne.s32.totalorder %s41, %s57
      %p59 = scmp.eq.s32.totalorder %s19, 0
      %p60 = por %p58, %p59
      %s61 = ssub.s32 %s20, %s32
      %p62 = scmp.eq.s32.totalorder %s61, 0
      %s64 = sadd.s32 %s63, 1
      %s65 = scalar_select %p62, %s63, %s64
      %p68 = pneg %p62
      %p69 = scmp.eq.s32.totalorder %s13, 1
      %p70 = por %p68, %p69
      %p71 = scmp.ne.s32.totalorder %s63, %s66
      %p72 = scmp.eq.s32.totalorder %s13, 0
      %p73 = por %p71, %p72
      %p74 = scmp.ne.s32.totalorder %s63, %s66
      %p75 = scmp.eq.s32.totalorder %s18, 1
      %p76 = por %p74, %p75
      %p77 = scmp.ne.s32.totalorder %s66, %s67
      %p78 = scmp.eq.s32.totalorder %s18, 0
      %p79 = por %p77, %p78
      %p80 = scmp.ne.s32.totalorder %s66, %s67
      %p81 = scmp.eq.s32.totalorder %s19, 1
      %p82 = por %p80, %p81
      %p84 = scmp.ne.s32.totalorder %s67, %s83
      %p85 = scmp.eq.s32.totalorder %s19, 0
      %p86 = por %p84, %p85
      %s87 = ssub.s32 %s20, %s32
      %p88 = scmp.eq.s32.totalorder %s87, 0
      %s90 = sadd.s32 %s89, 1
      %s91 = scalar_select %p88, %s89, %s90
      %p94 = pneg %p88
      %p95 = scmp.eq.s32.totalorder %s13, 1
      %p96 = por %p94, %p95
      %p97 = scmp.ne.s32.totalorder %s89, %s92
      %p98 = scmp.eq.s32.totalorder %s13, 0
      %p99 = por %p97, %p98
      %p100 = scmp.ne.s32.totalorder %s89, %s92
      %p101 = scmp.eq.s32.totalorder %s18, 1
      %p102 = por %p100, %p101
      %p103 = scmp.ne.s32.totalorder %s92, %s93
      %p104 = scmp.eq.s32.totalorder %s18, 0
      %p105 = por %p103, %p104
      %p106 = scmp.ne.s32.totalorder %s92, %s93
      %p107 = scmp.eq.s32.totalorder %s19, 1
      %p108 = por %p106, %p107
      %p110 = scmp.ne.s32.totalorder %s93, %s109
      %p111 = scmp.eq.s32.totalorder %s19, 0
      %p112 = por %p110, %p111
      %s113 = ssub.s32 %s20, %s32
      %p114 = scmp.eq.s32.totalorder %s113, 0
      %s116 = sadd.s32 %s115, 1
      %s117 = scalar_select %p114, %s115, %s116
      %p120 = pneg %p114
      %p121 = scmp.eq.s32.totalorder %s13, 1
      %p122 = por %p120, %p121
      %p123 = scmp.ne.s32.totalorder %s115, %s118
      %p124 = scmp.eq.s32.totalorder %s13, 0
      %p125 = por %p123, %p124
      %p126 = scmp.ne.s32.totalorder %s115, %s118
      %p127 = scmp.eq.s32.totalorder %s18, 1
      %p128 = por %p126, %p127
      %p129 = scmp.ne.s32.totalorder %s118, %s119
      %p130 = scmp.eq.s32.totalorder %s18, 0
      %p131 = por %p129, %p130
      %p132 = scmp.ne.s32.totalorder %s118, %s119
      %p133 = scmp.eq.s32.totalorder %s19, 1
      %p134 = por %p132, %p133
      %p136 = scmp.ne.s32.totalorder %s119, %s135
      %p137 = scmp.eq.s32.totalorder %s19, 0
      %p138 = por %p136, %p137
      %s139 = ssub.s32 %s20, %s32
      %s140 = ssub.s32 %s21, %s28
      %s141 = sor.u32 %s139, %s140
      %p142 = scmp.eq.s32.totalorder %s141, 0
      %s144 = sadd.s32 %s143, 1
      %s145 = scalar_select %p142, %s143, %s144
      %p148 = pneg %p142
      %p149 = scmp.eq.s32.totalorder %s13, 1
      %p150 = por %p148, %p149
      %p151 = scmp.ne.s32.totalorder %s143, %s146
      %p152 = scmp.eq.s32.totalorder %s13, 0
      %p153 = por %p151, %p152
      %p154 = scmp.ne.s32.totalorder %s143, %s146
      %p155 = scmp.eq.s32.totalorder %s18, 1
      %p156 = por %p154, %p155
      %p157 = scmp.ne.s32.totalorder %s146, %s147
      %p158 = scmp.eq.s32.totalorder %s18, 0
      %p159 = por %p157, %p158
      %p160 = scmp.ne.s32.totalorder %s146, %s147
      %p161 = scmp.eq.s32.totalorder %s19, 1
      %p162 = por %p160, %p161
      %p164 = scmp.ne.s32.totalorder %s147, %s163
      %p165 = scmp.eq.s32.totalorder %s19, 0
      %p166 = por %p164, %p165
      %p167 = scmp.le.s32.totalorder 1, %s13
      %p168 = scmp.lt.s32.totalorder %s13, 3
      %p169 = pnand %p167, %p168
      %p170 = pneg %p169
      // Predicated region
      $region9: #{tpu_custom_call.1} parent=5 // pred_check
        _
      $region10: #{tpu_custom_call.1} parent=5 // pred_check_branch
        %172 = sbr.rel (%p169) target = $region12
      $region11: #{tpu_custom_call.1} parent=5 // pred_region
        %s173 = ssub.s32 %s13, 1
      $region12: #{tpu_custom_call.1} parent=5 // pred_fallthru
        _
      %p174 = scmp.lt.s32.totalorder %s13, 2
      // Predicated region
      $region13: #{tpu_custom_call.1} parent=5 // pred_check
        %p175 = pneg %p174
      $region14: #{tpu_custom_call.1} parent=5 // pred_check_branch
        %177 = sbr.rel (%p175) target = $region16
      $region15: #{tpu_custom_call.1} parent=5 // pred_region
        // Predicated region
        $region17: #{tpu_custom_call.1} parent=15 // pred_check
          %p178 = pneg %p47
        $region18: #{tpu_custom_call.1} parent=15 // pred_check_branch
          %180 = sbr.rel (%p178) target = $region20
        $region19: #{tpu_custom_call.1} parent=15 // pred_region
          %p181 = scmp.lt.s32.totalorder %s20, 1
          %s182 = scalar_select %p181, %s20, 1
          %p183 = scmp.lt.s32.totalorder %s21, 0
          %s184 = scalar_select %p183, %s21, 0
          %s185 = sadd.s32 %s184, %s182
          %s186 = smul.addr %s185, 8
          %s187 = scalar_lea.vmem %s0, %s186
        $region20: #{tpu_custom_call.1} parent=15 // pred_fallthru
          _
        // Predicated region
        $region21: #{tpu_custom_call.1} parent=15 // pred_check
          %p188 = pneg %p73
        $region22: #{tpu_custom_call.1} parent=15 // pred_check_branch
          %190 = sbr.rel (%p188) target = $region24
        $region23: #{tpu_custom_call.1} parent=15 // pred_region
          %p191 = scmp.lt.s32.totalorder %s20, 1
          %s192 = scalar_select %p191, %s20, 1
          %s193 = smul.addr %s192, 4
          %s194 = smul.addr %s193, 8
          %s195 = scalar_lea.vmem %s1, %s194
        $region24: #{tpu_custom_call.1} parent=15 // pred_fallthru
          _
        // Predicated region
        $region25: #{tpu_custom_call.1} parent=15 // pred_check
          %p196 = pneg %p99
        $region26: #{tpu_custom_call.1} parent=15 // pred_check_branch
          %198 = sbr.rel (%p196) target = $region28
        $region27: #{tpu_custom_call.1} parent=15 // pred_region
          %p199 = scmp.lt.s32.totalorder %s20, 1
          %s200 = scalar_select %p199, %s20, 1
          %s201 = scalar_lea.vmem %s2, %s200
        $region28: #{tpu_custom_call.1} parent=15 // pred_fallthru
          _
        // Predicated region
        $region29: #{tpu_custom_call.1} parent=15 // pred_check
          %p202 = pneg %p125
        $region30: #{tpu_custom_call.1} parent=15 // pred_check_branch
          %204 = sbr.rel (%p202) target = $region32
        $region31: #{tpu_custom_call.1} parent=15 // pred_region
          %p205 = scmp.lt.s32.totalorder %s20, 1
          %s206 = scalar_select %p205, %s20, 1
          %s207 = scalar_lea.vmem %s3, %s206
        $region32: #{tpu_custom_call.1} parent=15 // pred_fallthru
          _
      $region16: #{tpu_custom_call.1} parent=5 // pred_fallthru
        _
      %p208 = scmp.le.s32.totalorder 1, %s13
      %p209 = scmp.lt.s32.totalorder %s13, 3
      %p210 = pnand %p208, %p209
      %p211 = pneg %p210
      // Predicated region
      $region33: #{tpu_custom_call.1} parent=5 // pred_check
        _
      $region34: #{tpu_custom_call.1} parent=5 // pred_check_branch
        %213 = sbr.rel (%p210) target = $region36
      $region35: #{tpu_custom_call.1} parent=5 // pred_region
        %s214 = ssub.s32 %s13, 1
        %p215 = scmp.lt.s32.totalorder %s22, 1
        %s216 = scalar_select %p215, %s22, 1
        %p217 = scmp.lt.s32.totalorder %s23, 0
        %s218 = scalar_select %p217, %s23, 0
        %s219 = sadd.s32 %s218, %s216
        %s220 = smul.addr %s219, 8
        %s221 = scalar_lea.vmem %s0, %s220
        %p222 = pneg %p53
        %p223 = pneg %p50
        %p224 = scmp.lt.s32.totalorder %s22, 1
        %s225 = scalar_select %p224, %s22, 1
        %s226 = smul.addr %s225, 4
        %s227 = smul.addr %s226, 8
        %s228 = scalar_lea.vmem %s1, %s227
        %p229 = pneg %p79
        %p230 = pneg %p76
        %p231 = scmp.lt.s32.totalorder %s22, 1
        %s232 = scalar_select %p231, %s22, 1
        %s233 = scalar_lea.vmem %s2, %s232
        %p234 = pneg %p105
        %p235 = pneg %p102
        %p236 = scmp.lt.s32.totalorder %s22, 1
        %s237 = scalar_select %p236, %s22, 1
        %s238 = scalar_lea.vmem %s3, %s237
        %p239 = pneg %p131
        %p240 = pneg %p128
        %p241 = pneg %p159
        %p242 = pneg %p156
        %s243 = sand.u32 %s146, 1
        %s244 = scalar_lea.sflag [#allocation3], %s243
        %s245 = sand.u32 %s146, 1
        %s246 = smul.addr %s245, 8
        %s247 = scalar_lea.vmem [#allocation2], %s246
        %p248 = scmp.lt.s32.totalorder %s22, 1
        %s249 = scalar_select %p248, %s22, 1
        %p250 = scmp.lt.s32.totalorder %s23, 0
        %s251 = scalar_select %p250, %s23, 0
        %s252 = sadd.s32 %s251, %s249
        %s253 = smul.addr %s252, 8
        %s254 = scalar_lea.vmem %s0, %s253
        %p255 = scmp.lt.s32.totalorder %s22, 1
        %s256 = scalar_select %p255, %s22, 1
        %s257 = smul.addr %s256, 4
        %s258 = smul.addr %s257, 8
        %s259 = scalar_lea.vmem %s1, %s258
        %p260 = scmp.lt.s32.totalorder %s22, 1
        %s261 = scalar_select %p260, %s22, 1
        %s262 = scalar_lea.vmem %s2, %s261
        %p263 = scmp.lt.s32.totalorder %s22, 1
        %s264 = scalar_select %p263, %s22, 1
        %s265 = scalar_lea.vmem %s3, %s264
        %v266 = vld [vmem:[%s254] sm:$0xff]
        %vm267 = vcmask 261120
        %v268 = vsel %vm267, %v266, 0.0
        %269 = vadd.xlane.f32.xlu0 %v268
        %v270 = vpop.xlane.xlu0 %269
        %v271 = vmul.f32 %v270, 0.03125
        %v272 = vmul.f32 %v266, %v266
        %v273 = vsel %vm267, %v272, 0.0
        %274 = vadd.xlane.f32.xlu0 %v273
        %v275 = vpop.xlane.xlu0 %274
        %v276 = vmul.f32 %v275, 0.03125
        %v277 = vmul.f32 %v271, %v271
        %v278 = vsub.f32 %v276, %v277
        %v279 = vmax.f32 %v278, 0.0
        %v280 = vadd.f32 %v279, 1e-06
        %v281 = vrsqrt.pop %v280
        %v282 = vmul.f32 %v281, %v280
        %v283 = vmul.f32 %v282, %v281
        %v284 = vmul.f32 0.5, %v283
        %v285 = vsub.f32 1.5, %v284
        %v286 = vmul.f32 %v281, %v285
        %vm287 = vweird.f32 %v280
        %vm288 = vweird.f32 %v281
        %vm289 = vmor %vm287, %vm288
        %v290 = vsel %vm289, %v281, %v286
        %v291 = vld [vmem:[%s259] sm:$0xff]
        %v292 = vld [vmem:[%s259 + $0x8] sm:$0xff]
        %v293 = vld [vmem:[%s259 + $0x10] sm:$0xff]
        %v294 = vld [vmem:[%s259 + $0x18] sm:$0xff]
        %v296 = vsel %vm267, %v266, 0
        %298 = vmatpush.msra.mxu0 0.0
        %299 = vmatpush.msra.mxu0 0.0
        %300 = vmatpush.msra.mxu0 0.0
        %301 = vmatpush.msra.mxu0 0.0
        %302 = vmatpush.msra.mxu0 0.0
        %303 = vmatpush.msra.mxu0 0.0
        %304 = vmatpush.msra.mxu0 0.0
        %305 = vmatpush.msra.mxu0 0.0
        %306 = vmatpush.msra.mxu0 0.0
        %307 = vmatpush.msra.mxu0 0.0
        %308 = vmatpush.msra.mxu0 0.0
        %309 = vmatpush.msra.mxu0 0.0
        %310 = vmatpush.msra.mxu0 %v294
        %311 = vmatpush.msra.mxu0 %v293
        %312 = vmatpush.msra.mxu0 %v292
        %313 = vmatpush.msra.mxu0 %v291
        %314 = vmatmul.f32.gmra.mxu0 %v296
        %v315 = vpop.f32.mrf.mxu0
        %v316 = vadd.f32 0.0, %v315
        %317 = vdwg.mxu0
        %v318 = vmul.f32 %v290, %v316
        %v319 = vmul.f32 %v271, %v290
        %v320 = vld [vmem:[%s262] sm:$0x1]
        %v322 = vperm.slane %v320, 0
        %v324 = vmul.f32 %v319, %v322
        %v325 = vsub.f32 %v318, %v324
        %v326 = vld [vmem:[%s265] sm:$0x1]
        %v328 = vperm.slane %v326, 0
        %v330 = vadd.f32 %v325, %v328
        %vm331 = vcmask 130048
        %332 = vst.msk [vmem:[%s247] sm:$0xff] %vm331, %v330
        %s333 = sand.u32 %s146, 1
        %s334 = scalar_lea.sflag [#allocation3], %s333
        %s335 = sand.u32 %s146, 1
        %s336 = smul.addr %s335, 8
        %s337 = scalar_lea.vmem [#allocation2], %s336
        // Predicated region
        $region37: #{tpu_custom_call.1} parent=35 // pred_check
          %p338 = pneg %p156
        $region38: #{tpu_custom_call.1} parent=35 // pred_check_branch
          %340 = sbr.rel (%p338) target = $region40
        $region39: #{tpu_custom_call.1} parent=35 // pred_region
          %342 = vsyncadd %s334, 0
          %s343 = sadd.s32 %s23, %s22
          %s344 = smul.addr %s343, 8
          %s345 = scalar_lea.hbm %s4, %s344
          %s347 = sshll.u32 %s337, 4
          %s348 = int_to_ptr.vmem [resolvable:$true] %s347
          %s349 = sshll.u32 %s345, 4
          %s350 = int_to_ptr.hbm [resolvable:$true] %s349
          %352 = dma.vmem_to_hbm [thread:$0]  %s348, 128, %s350, %s334
        $region40: #{tpu_custom_call.1} parent=35 // pred_fallthru
          _
      $region36: #{tpu_custom_call.1} parent=5 // pred_fallthru
        _
      %p353 = scmp.le.s32.totalorder 2, %s13
      // Predicated region
      $region41: #{tpu_custom_call.1} parent=5 // pred_check
        %p354 = pneg %p353
      $region42: #{tpu_custom_call.1} parent=5 // pred_check_branch
        %356 = sbr.rel (%p354) target = $region44
      $region43: #{tpu_custom_call.1} parent=5 // pred_region
        %s357 = ssub.s32 %s13, 2
        // Predicated region
        $region45: #{tpu_custom_call.1} parent=43 // pred_check
          %p358 = pneg %p162
        $region46: #{tpu_custom_call.1} parent=43 // pred_check_branch
          %360 = sbr.rel (%p358) target = $region48
        $region47: #{tpu_custom_call.1} parent=43 // pred_region
          %s361 = sand.u32 %s147, 1
          %s362 = scalar_lea.sflag [#allocation3], %s361
          %s363 = sand.u32 %s147, 1
          %s364 = smul.addr %s363, 8
          %s365 = scalar_lea.vmem [#allocation2], %s364
          %367 = dma.done %s362, 128
        $region48: #{tpu_custom_call.1} parent=43 // pred_fallthru
          _
      $region44: #{tpu_custom_call.1} parent=5 // pred_fallthru
        _
    $region6: #{tpu_custom_call.1} parent=1 // loop_footer
      %s17 = sadd.s32 1, %s13
    $region7: #{tpu_custom_call.1} parent=1 // loop_footer_branch
      %12 = sbr.rel target = $region3
    $region8: #{tpu_custom_call.1} parent=1 // loop_exit
      _
    %368 = vsyncpa [#allocation3], 1
    %s369 = scalar_lea.sflag [#allocation3], 1
    %370 = vsyncpa %s369, 1

</llo_original>
